<compile_context>
chip_gen: v6e
topology: v6e:2x2x1
jax: 0.10.0
libtpu: 0.0.40
codegen_flags: <defaults>
</compile_context>

<pallas_src>
import jax
import jax.numpy as jnp
import numpy as np
from jax.experimental import pallas as pl
from jax.experimental.pallas import tpu as pltpu


def _round_up(x, m):
    return ((x + m - 1) // m) * m


def _pick_tn(Np):
    # Largest lane-dense N tile that still exposes >=2 N tiles (keeps both
    # TensorCores busy on v7x); small layers use a single full-width tile.
    for cand in (1024, 512, 384, 256, 128):
        if Np % cand == 0 and Np // cand >= 2:
            return cand
    return Np


# ----------------------------------------------------------------------------
# Kernels
# ----------------------------------------------------------------------------
def _linear_kernel_fullk(x_ref, wt_ref, b_ref, o_ref):
    # x_ref: (tm, K) bf16, wt_ref: (K, tn) bf16, b_ref: (1, tn) f32,
    # o_ref: (tm, tn).  Single pass: MXU matmul (f32 acc) + bias + cast.
    o_ref[...] = (
        jnp.dot(x_ref[...], wt_ref[...], preferred_element_type=jnp.float32)
        + b_ref[...]
    ).astype(o_ref.dtype)


def _linear_kernel_ktiled(x_ref, wt_ref, b_ref, o_ref, acc_ref):
    # Fallback for very large K: classic K-reduction with f32 VMEM accumulator.
    k = pl.program_id(2)

    @pl.when(k == 0)
    def _():
        acc_ref[...] = jnp.zeros_like(acc_ref)

    acc_ref[...] += jnp.dot(
        x_ref[...], wt_ref[...], preferred_element_type=jnp.float32
    )

    @pl.when(k == pl.num_programs(2) - 1)
    def _():
        # Bias add once per output tile, in f32, then cast + single store.
        o_ref[...] = (acc_ref[...] + b_ref[...]).astype(o_ref.dtype)


# ----------------------------------------------------------------------------
# One-time parameter preparation (hoisted out of the forward pass)
# ----------------------------------------------------------------------------
def prepare_params(w, b, *, compute_dtype=jnp.bfloat16,
                   vmem_budget_bytes=40 * 1024 * 1024):
    """Pre-transpose, cast and pad the weights ONCE.

    Args:
      w: (num_outputs, num_inputs) float32 -- PyTorch nn.Linear layout.
      b: (num_outputs,) float32
    Returns a dict holding the kernel-ready operands and static tiling info.
    """
    N, K = w.shape
    Np = _round_up(N, 128)
    tn = _pick_tn(Np)

    # Decide once whether full-K operand blocks fit a conservative VMEM budget
    # (collapsed-K 2-D grid) or whether we must K-tile (huge K only).
    tm_max = 256  # batch is small for NTM controllers
    fullk_bytes = (
        tm_max * K * 2 * 2        # x tile, double-buffered bf16
        + K * tn * 2 * 3          # weight tile, up to 3 buffers bf16
        + tm_max * tn * 4 * 2     # output tile, double-buffered f32
        + tn * 4 * 2              # bias
    )
    if fullk_bytes <= vmem_budget_bytes:
        tk = None                 # collapsed K (no reduction grid axis)
        Kp = K                    # block == full dim -> no K padding needed
    else:
        tk = 512
        Kp = _round_up(K, tk)

    wt = jnp.transpose(w).astype(compute_dtype)           # (K, N) bf16
    if (Kp, Np) != (K, N):
        wt = jnp.zeros((Kp, Np), compute_dtype).at[:K, :N].set(wt)
    bp = b.astype(jnp.float32).reshape(1, N)
    if Np != N:
        bp = jnp.zeros((1, Np), jnp.float32).at[:, :N].set(bp)

    return dict(wt=wt, b=bp, K=K, N=N, Kp=Kp, Np=Np, tn=tn, tk=tk,
                compute_dtype=compute_dtype)


# ----------------------------------------------------------------------------
# Forward pass
# ----------------------------------------------------------------------------
def mlp_controller_forward(x, params, state):
    """Pallas implementation of MLPController.forward.

    Args:
      x:      (batch, num_inputs) float32
      params: output of prepare_params(w, b)
      state:  passed through unchanged (like the PyTorch module)
    Returns:
      (out, state) with out of shape (batch, num_outputs), dtype of x.
    """
    M, K = x.shape
    assert K == params["K"], "input feature dim mismatch"
    N, Kp, Np = params["N"], params["Kp"], params["Np"]
    tn, tk = params["tn"], params["tk"]
    cdt = params["compute_dtype"]
    out_dtype = x.dtype

    # M (batch) tiling: a single sublane-aligned tile for typical NTM batches.
    if M <= 512:
        tm = max(8, _round_up(M, 8))
        Mp = tm
    else:
        tm = 256
        Mp = _round_up(M, tm)

    # Cast x to the compute dtype (tiny: batch x K); pad only if ragged.
    xc = x.astype(cdt)
    if (Mp, Kp) != (M, K):
        xc = jnp.zeros((Mp, Kp), cdt).at[:M, :K].set(xc)

    grid_m, grid_n = Mp // tm, Np // tn
    vmem_limit = 48 * 1024 * 1024  # safe on v7x (64 MiB phys), ample on v5e/v6e

    if tk is None:
        # Collapsed-K path: 2-D grid, one MXU pass per output tile, no
        # accumulator read-modify-write, no K-step overhead.
        out_padded = pl.pallas_call(
            _linear_kernel_fullk,
            out_shape=jax.ShapeDtypeStruct((Mp, Np), out_dtype),
            grid=(grid_m, grid_n),
            in_specs=[
                pl.BlockSpec((tm, Kp), lambda i, j: (i, 0)),   # x (resident over j)
                pl.BlockSpec((Kp, tn), lambda i, j: (0, j)),   # Wt (streamed)
                pl.BlockSpec((1, tn), lambda i, j: (0, j)),    # bias
            ],
            out_specs=pl.BlockSpec((tm, tn), lambda i, j: (i, j)),
            compiler_params=pltpu.CompilerParams(
                dimension_semantics=("parallel", "parallel"),
                vmem_limit_bytes=vmem_limit,
            ),
        )(xc, params["wt"], params["b"])
    else:
        # K-tiled fallback (very large K): reduction axis last, f32 VMEM acc,
        # 3-deep buffering on the streamed weight operand.
        grid = (grid_m, grid_n, Kp // tk)
        out_padded = pl.pallas_call(
            _linear_kernel_ktiled,
            out_shape=jax.ShapeDtypeStruct((Mp, Np), out_dtype),
            grid=grid,
            in_specs=[
                pl.BlockSpec((tm, tk), lambda i, j, k: (i, k)),
                pl.BlockSpec((tk, tn), lambda i, j, k: (k, j),
                             pipeline_mode=pl.Buffered(3)),
                pl.BlockSpec((1, tn), lambda i, j, k: (0, j)),
            ],
            out_specs=pl.BlockSpec((tm, tn), lambda i, j, k: (i, j)),
            scratch_shapes=[pltpu.VMEM((tm, tn), jnp.float32)],
            compiler_params=pltpu.CompilerParams(
                dimension_semantics=("parallel", "parallel", "arbitrary"),
                vmem_limit_bytes=vmem_limit,
            ),
        )(xc, params["wt"], params["b"])

    out = out_padded
    if (Mp, Np) != (M, N):
        out = out_padded[:M, :N]
    return out, state


# ----------------------------------------------------------------------------
# Module plumbing matching the PyTorch class
# ----------------------------------------------------------------------------
def create_new_state(batch_size):
    # Matches MLPController.create_new_state: torch.zeros(1, batch_size, 1)
    return jnp.zeros((1, batch_size, 1), dtype=jnp.float32)


def init_params(key, num_inputs, num_outputs):
    """Matches reset_parameters(): weight ~ U(-stdev, stdev),
    stdev = 5/sqrt(num_inputs+num_outputs); bias = 0.
    (num_layers is stored but unused by the PyTorch forward.)"""
    stdev = 5.0 / np.sqrt(num_inputs + num_outputs)
    w = jax.random.uniform(
        key, (num_outputs, num_inputs), dtype=jnp.float32,
        minval=-stdev, maxval=stdev)
    b = jnp.zeros((num_outputs,), dtype=jnp.float32)
    return w, b


if __name__ == "__main__":
    # ---- Primary test: module-sized shapes, collapsed-K path -------------
    num_inputs = 32
    num_outputs = 32
    batch = 2

    key = jax.random.PRNGKey(0)
    k_w, k_x = jax.random.split(key)

    w, b = init_params(k_w, num_inputs, num_outputs)
    x = jax.random.normal(k_x, (batch, num_inputs), dtype=jnp.float32)
    state = create_new_state(batch)

    params = prepare_params(w, b)          # one-time weight prep
    assert params["tk"] is None            # small layer -> collapsed-K path

    out, new_state = mlp_controller_forward(x, params, state)
    out = jax.block_until_ready(out)

    # Reference with the same bf16-input / f32-accumulate math as the kernel.
    ref_bf16 = (
        jnp.dot(x.astype(jnp.bfloat16), w.T.astype(jnp.bfloat16),
                preferred_element_type=jnp.float32)
        + b
    ).astype(x.dtype)
    np.testing.assert_allclose(np.asarray(out), np.asarray(ref_bf16),
                               rtol=1e-3, atol=1e-3)

    # Sanity vs full-f32 nn.Linear semantics (loose tol for bf16 inputs).
    ref_f32 = x @ w.T + b
    np.testing.assert_allclose(np.asarray(out), np.asarray(ref_f32),
                               rtol=5e-2, atol=5e-2)

    assert out.shape == (batch, num_outputs)
    assert new_state.shape == (1, batch, 1)

    # ---- Secondary test: force the K-tiled fallback path ------------------
    K2, N2, B2 = 1200, 256, 4
    k_w2, k_x2 = jax.random.split(jax.random.PRNGKey(1))
    w2, b2 = init_params(k_w2, K2, N2)
    params2 = prepare_params(w2, b2, vmem_budget_bytes=0)   # force K-tiling
    assert params2["tk"] is not None
    x2 = jax.random.normal(k_x2, (B2, K2), dtype=jnp.float32)
    out2, _ = mlp_controller_forward(x2, params2, create_new_state(B2))
    out2 = jax.block_until_ready(out2)
    ref2 = (
        jnp.dot(x2.astype(jnp.bfloat16), w2.T.astype(jnp.bfloat16),
                preferred_element_type=jnp.float32)
        + b2
    ).astype(x2.dtype)
    np.testing.assert_allclose(np.asarray(out2), np.asarray(ref2),
                               rtol=1e-2, atol=1e-2)
    assert out2.shape == (B2, N2)

    print("KERNEL_OK")
</pallas_src>

<mosaic_0001>
module attributes {stable_mosaic.version = 11 : i64} {
  func.func @_linear_kernel_fullk(%arg0: i32, %arg1: i32, %arg2: memref<8x32xbf16, #tpu.memory_space<vmem>>, %arg3: memref<32x128xbf16, #tpu.memory_space<vmem>>, %arg4: memref<1x128xf32, #tpu.memory_space<vmem>>, %arg5: memref<8x128xf32, #tpu.memory_space<vmem>>) attributes {dimension_semantics = [#tpu.dimension_semantics<parallel>, #tpu.dimension_semantics<parallel>], iteration_bounds = array<i64: 1, 1>, scalar_prefetch = 0 : i64, scratch_operands = 0 : i64, tpu.core_type = #tpu.core_type<tc>, window_params = [{transform_indices = @transform_0, window_bounds = array<i64: 8, 32>}, {transform_indices = @transform_1, window_bounds = array<i64: 32, 128>}, {transform_indices = @transform_2, window_bounds = array<i64: 1, 128>}, {transform_indices = @transform_3, window_bounds = array<i64: 8, 128>}]} {
    %c0 = arith.constant 0 : index
    %c0_0 = arith.constant 0 : index
    %0 = vector.load %arg2[%c0, %c0_0] : memref<8x32xbf16, #tpu.memory_space<vmem>>, vector<8x32xbf16>
    %c0_1 = arith.constant 0 : index
    %c0_2 = arith.constant 0 : index
    %1 = vector.load %arg3[%c0_1, %c0_2] : memref<32x128xbf16, #tpu.memory_space<vmem>>, vector<32x128xbf16>
    %cst = arith.constant dense<0.000000e+00> : vector<8x128xf32>
    %2 = tpu.matmul %0, %1, %cst {dimension_numbers = #tpu.dot_dimension_numbers<[1], [0], [0], [1], [0, 0, 1, 1], [], []>} : vector<8x32xbf16>, vector<32x128xbf16>, vector<8x128xf32> -> vector<8x128xf32>
    %c0_3 = arith.constant 0 : index
    %c0_4 = arith.constant 0 : index
    %3 = vector.load %arg4[%c0_3, %c0_4] : memref<1x128xf32, #tpu.memory_space<vmem>>, vector<1x128xf32>
    %4 = vector.broadcast %3 : vector<1x128xf32> to vector<8x128xf32>
    %5 = arith.addf %2, %4 : vector<8x128xf32>
    %c0_5 = arith.constant 0 : index
    %c0_6 = arith.constant 0 : index
    %6 = vector.load %arg5[%c0_5, %c0_6] : memref<8x128xf32, #tpu.memory_space<vmem>>, vector<8x128xf32>
    tpu.vector_store %arg5[%c0_5, %c0_6], %5 {strides = array<i32>} : memref<8x128xf32, #tpu.memory_space<vmem>>, vector<8x128xf32>,
    return
  }
  func.func @transform_0(%arg0: i32, %arg1: i32) -> (i32, i32) {
    %c0_i32 = arith.constant 0 : i32
    %c0_i32_0 = arith.constant 0 : i32
    return %arg0, %c0_i32 : i32, i32
  }
  func.func @transform_1(%arg0: i32, %arg1: i32) -> (i32, i32) {
    %c0_i32 = arith.constant 0 : i32
    %c0_i32_0 = arith.constant 0 : i32
    return %c0_i32, %arg1 : i32, i32
  }
  func.func @transform_2(%arg0: i32, %arg1: i32) -> (i32, i32) {
    %c0_i32 = arith.constant 0 : i32
    %c0_i32_0 = arith.constant 0 : i32
    return %c0_i32, %arg1 : i32, i32
  }
  func.func @transform_3(%arg0: i32, %arg1: i32) -> (i32, i32) {
    %c0_i32 = arith.constant 0 : i32
    return %arg0, %arg1 : i32, i32
  }
}

</mosaic_0001>

<llo_original>
// kernel: tpu_custom_call.1
$region0: #{tpu_custom_call.1}
  #allocation0 [shape = 'u32[]', space=smem, size = 0x4, offset = 0x4, fixed_abs, tag = 'smem constant byte address 0x4 - core index']
  #allocation1 [shape = 'u32[144,128]{1,0:T(1,128)}', space=vmem, size = 0x12000, scoped, tag = 'internal scratch']
  %s0 = inlined_call_operand.hbm [shape: bf16[8,32], index: 0, kind: input, shape index: {}]
  %s1 = inlined_call_operand.hbm [shape: bf16[32,128], index: 1, kind: input, shape index: {}]
  %s2 = inlined_call_operand.vmem [shape: f32[1,128], index: 2, kind: input, shape index: {}]
  %s3 = inlined_call_operand.hbm [shape: f32[8,128], index: 3, kind: output, shape index: {}]
  %s4 = sld [smem:[#allocation0]]
  $region30: #{tpu_custom_call.1} parent=0
    _
  %s6 = ssub.s32 1, %s4
  %s7 = scalar_select 0, %s6, %s4
  $region1: #{tpu_custom_call.1} parent=0
    #allocation2 [shape = 'u8[2048]{0}', space=vmem, size = 0x800, scoped, tag = 'input window, operand 0, single buffered']
    #allocation3 [shape = 's32[1]{0}', space=sflag, size = 0x4, scoped, tag = 'scoped memory for tpu_custom_call.1']
    #allocation4 [shape = 's32[1]{0}', space=sflag, size = 0x4, scoped, tag = 'scoped memory for tpu_custom_call.1']
    #allocation5 [shape = 'u8[8192]{0}', space=vmem, size = 0x2000, scoped, tag = 'input window, operand 1, single buffered']
    #allocation6 [shape = 's32[1]{0}', space=sflag, size = 0x4, scoped, tag = 'scoped memory for tpu_custom_call.1']
    #allocation7 [shape = 'u8[4096]{0}', space=vmem, size = 0x1000, scoped, tag = 'output window, operand 0, single buffered']
    %8 = vsyncpa [#allocation3], 0
    %9 = vsyncpa [#allocation6], 0
    %10 = vsyncpa [#allocation4], 0
    // Predicated region
    $region2: #{tpu_custom_call.1} parent=1 // pred_check
      _
    $region3: #{tpu_custom_call.1} parent=1 // pred_check_branch
      %12 = sbr.rel (0) target = $region5
    $region4: #{tpu_custom_call.1} parent=1 // pred_region
      %s14 = ssub.s32 64, 64
      %15 = vsyncadd [#allocation3], %s14
      %s17 = sshll.u32 [#allocation2], 4
      %s18 = int_to_ptr.vmem [resolvable:$true] %s17
      %20 = dma.hbm_to_vmem [thread:$0]  %s0, 64, %s18, [#allocation3]
    $region5: #{tpu_custom_call.1} parent=1 // pred_fallthru
      _
    // Predicated region
    $region6: #{tpu_custom_call.1} parent=1 // pred_check
      _
    $region7: #{tpu_custom_call.1} parent=1 // pred_check_branch
      %22 = sbr.rel (0) target = $region9
    $region8: #{tpu_custom_call.1} parent=1 // pred_region
      %s24 = ssub.s32 256, 256
      %25 = vsyncadd [#allocation6], %s24
      %s26 = sshll.u32 [#allocation5], 4
      %s27 = int_to_ptr.vmem [resolvable:$true] %s26
      %32 = dma.hbm_to_vmem [thread:$0]  %s1, 256, %s27, [#allocation6], 64, 64, 4
    $region9: #{tpu_custom_call.1} parent=1 // pred_fallthru
      _
    // Predicated region
    $region10: #{tpu_custom_call.1} parent=1 // pred_check
      _
    $region11: #{tpu_custom_call.1} parent=1 // pred_check_branch
      %34 = sbr.rel (0) target = $region13
    $region12: #{tpu_custom_call.1} parent=1 // pred_region
      _
    $region13: #{tpu_custom_call.1} parent=1 // pred_fallthru
      _
    // Predicated region
    $region14: #{tpu_custom_call.1} parent=1 // pred_check
      _
    $region15: #{tpu_custom_call.1} parent=1 // pred_check_branch
      %36 = sbr.rel (0) target = $region17
    $region16: #{tpu_custom_call.1} parent=1 // pred_region
      %37 = dma.done [#allocation3], 64
    $region17: #{tpu_custom_call.1} parent=1 // pred_fallthru
      _
    // Predicated region
    $region18: #{tpu_custom_call.1} parent=1 // pred_check
      _
    $region19: #{tpu_custom_call.1} parent=1 // pred_check_branch
      %39 = sbr.rel (0) target = $region21
    $region20: #{tpu_custom_call.1} parent=1 // pred_region
      %40 = dma.done [#allocation6], 256
    $region21: #{tpu_custom_call.1} parent=1 // pred_fallthru
      _
    %v42 = vld [vmem:[#allocation2] sm:$0xf]
    %v43 = vld [vmem:[#allocation5] sm:$0xf]
    %v44 = vld [vmem:[#allocation5 + $0x4] sm:$0xf]
    %v45 = vld [vmem:[#allocation5 + $0x8] sm:$0xf]
    %v46 = vld [vmem:[#allocation5 + $0xc] sm:$0xf]
    %v47 = vld [vmem:[%s2] sm:$0x1]
    %v49 = vlaneseq
    %v50 = vshrl.u32 %v49, 7
    %v51 = vsub.s32 0, %v50
    %v52 = vrot.slane %v47, %v51
    %v58 = vunpack.c.l.b16 %v43
    %v59 = vunpack.c.l.b16 %v44
    %v60 = vunpack.c.l.b16 %v45
    %v61 = vunpack.c.l.b16 %v46
    %v62 = vpack.c.b16 %v59, %v58
    %v63 = vpack.c.b16 %v61, %v60
    %vm66 = vcmask 261120
    %v68 = vsel %vm66, %v42, 0
    %70 = vmatprep.subr.bf16.mxu0 0
    %71 = vmatpush1.bf16.msra.mxu0 0
    %72 = vmatprep.subr.bf16.mxu0 0
    %73 = vmatpush1.bf16.msra.mxu0 0
    %74 = vmatprep.subr.bf16.mxu0 0
    %75 = vmatpush1.bf16.msra.mxu0 0
    %76 = vmatprep.subr.bf16.mxu0 0
    %77 = vmatpush1.bf16.msra.mxu0 0
    %78 = vmatprep.subr.bf16.mxu0 0
    %79 = vmatpush1.bf16.msra.mxu0 0
    %80 = vmatprep.subr.bf16.mxu0 0
    %81 = vmatpush1.bf16.msra.mxu0 0
    %82 = vmatprep.subr.bf16.mxu0 0
    %83 = vmatpush1.bf16.msra.mxu0 %v63
    %84 = vmatprep.subr.bf16.mxu0 0
    %85 = vmatpush1.bf16.msra.mxu0 %v62
    %86 = vmatprep.subr.bf16.mxu0 0
    %87 = vmatpush2.bf16.msra.mxu0 0
    %88 = vmatprep.subr.bf16.mxu0 0
    %89 = vmatpush2.bf16.msra.mxu0 0
    %90 = vmatprep.subr.bf16.mxu0 0
    %91 = vmatpush2.bf16.msra.mxu0 0
    %92 = vmatprep.subr.bf16.mxu0 0
    %93 = vmatpush2.bf16.msra.mxu0 0
    %94 = vmatprep.subr.bf16.mxu0 0
    %95 = vmatpush2.bf16.msra.mxu0 0
    %96 = vmatprep.subr.bf16.mxu0 0
    %97 = vmatpush2.bf16.msra.mxu0 0
    %98 = vmatprep.subr.bf16.mxu0 0
    %99 = vmatpush2.bf16.msra.mxu0 0
    %100 = vmatprep.subr.bf16.mxu0 0
    %101 = vmatpush2.bf16.msra.mxu0 0
    %102 = vmatprep.mubr.bf16.mxu0 0
    %103 = vmatmul.mubr.bf16.gmra.mxu0 %v68
    %v104 = vpop.f32.mrf.mxu0
    %v105 = vadd.f32 %v52, %v104
    %v106 = vpop.f32.mrf.mxu0
    %v107 = vpop.f32.mrf.mxu0
    %v108 = vpop.f32.mrf.mxu0
    %109 = vdwg.mxu0
    %110 = vst [vmem:[#allocation7] sm:$0xff] %v105
    // Predicated region
    $region22: #{tpu_custom_call.1} parent=1 // pred_check
      _
    $region23: #{tpu_custom_call.1} parent=1 // pred_check_branch
      %112 = sbr.rel (0) target = $region25
    $region24: #{tpu_custom_call.1} parent=1 // pred_region
      %s114 = ssub.s32 128, 128
      %115 = vsyncadd [#allocation4], %s114
      %s117 = sshll.u32 [#allocation7], 4
      %s118 = int_to_ptr.vmem [resolvable:$true] %s117
      %120 = dma.vmem_to_hbm [thread:$0]  %s118, 128, %s3, [#allocation4]
    $region25: #{tpu_custom_call.1} parent=1 // pred_fallthru
      _
    // Predicated region
    $region26: #{tpu_custom_call.1} parent=1 // pred_check
      _
    $region27: #{tpu_custom_call.1} parent=1 // pred_check_branch
      %122 = sbr.rel (0) target = $region29
    $region28: #{tpu_custom_call.1} parent=1 // pred_region
      %123 = dma.done [#allocation4], 128
    $region29: #{tpu_custom_call.1} parent=1 // pred_fallthru
      _
    %124 = vsyncpa [#allocation3], 1
    %125 = vsyncpa [#allocation6], 1
    %126 = vsyncpa [#allocation4], 1

</llo_original>
